<compile_context>
chip_gen: v7x
topology: tpu7x:2x2x1
jax: 0.10.0
libtpu: 0.0.40
codegen_flags: <defaults>
</compile_context>

<pallas_src>
from functools import partial

import jax
import jax.numpy as jnp
from jax.experimental import pallas as pl
from jax.experimental.pallas import tpu as pltpu


def _round_up(x, m):
    return ((x + m - 1) // m) * m


# ---------------------------------------------------------------------------
# Kernels.  Signature: inputs..., outputs..., scratch...
# `hid_ref` is either the second output (return_hidden=True) or a VMEM
# scratch buffer (return_hidden=False) -- same body works for both.
# ---------------------------------------------------------------------------
def _fwd_kernel(x_ref, w0_ref, w1_ref, out_ref, hid_ref):
    hid_ref[...] = jnp.clip(
        jnp.dot(x_ref[...], w0_ref[...], preferred_element_type=jnp.float32),
        0.0, 1.0)
    out_ref[...] = jnp.dot(hid_ref[...], w1_ref[...],
                           preferred_element_type=jnp.float32)


def _fwd_kernel_bias(x_ref, w0_ref, w1_ref, b1_ref, b2_ref, out_ref, hid_ref):
    hid_ref[...] = jnp.clip(
        jnp.dot(x_ref[...], w0_ref[...], preferred_element_type=jnp.float32)
        + b1_ref[...],
        0.0, 1.0)
    out_ref[...] = (jnp.dot(hid_ref[...], w1_ref[...],
                            preferred_element_type=jnp.float32)
                    + b2_ref[...])


# ---------------------------------------------------------------------------
# Shared (traced) forward core.
# ---------------------------------------------------------------------------
def _forward_core(x, w0f, w1p, b1, b2, out_size, return_hidden, batch_tile):
    squeeze = (x.ndim == 1)
    x2 = jnp.atleast_2d(x).astype(jnp.float32)               # (B, I)
    B, I = x2.shape
    H = w0f.shape[1]
    O_pad = w1p.shape[1]

    use_grid = B > batch_tile
    if use_grid:
        Bp = _round_up(B, batch_tile)
    else:
        Bp = max(8, _round_up(B, 8))                          # full sublane
    xp = x2 if Bp == B else jnp.pad(x2, ((0, Bp - B), (0, 0)))

    has_bias = b1 is not None
    kernel = _fwd_kernel_bias if has_bias else _fwd_kernel
    inputs = (xp, w0f, w1p) + ((b1, b2) if has_bias else ())

    flops = 2 * Bp * (I * H + H * O_pad)
    bytes_accessed = 4 * (Bp * I + I * H + H * O_pad + Bp * O_pad
                          + (Bp * H if return_hidden else 0))
    ce = pl.CostEstimate(flops=flops, transcendentals=0,
                         bytes_accessed=bytes_accessed)

    if return_hidden:
        out_shape = (jax.ShapeDtypeStruct((Bp, O_pad), jnp.float32),
                     jax.ShapeDtypeStruct((Bp, H), jnp.float32))
        scratch = []
    else:
        out_shape = jax.ShapeDtypeStruct((Bp, O_pad), jnp.float32)
        scratch_rows = batch_tile if use_grid else Bp
        scratch = [pltpu.VMEM((scratch_rows, H), jnp.float32)]

    if not use_grid:
        # Whole problem fits trivially in VMEM: grid-less call, full blocks.
        vmem = pl.BlockSpec(memory_space=pltpu.MemorySpace.VMEM)
        in_specs = [vmem] * len(inputs)
        out_specs = (vmem, vmem) if return_hidden else vmem
        res = pl.pallas_call(
            kernel, out_shape=out_shape,
            in_specs=in_specs, out_specs=out_specs,
            scratch_shapes=scratch, cost_estimate=ce,
        )(*inputs)
    else:
        TB = batch_tile
        grid = (Bp // TB,)
        in_specs = [pl.BlockSpec((TB, I), lambda i: (i, 0)),
                    pl.BlockSpec((I, H), lambda i: (0, 0)),      # resident
                    pl.BlockSpec((H, O_pad), lambda i: (0, 0))]  # resident
        if has_bias:
            in_specs += [pl.BlockSpec((1, H), lambda i: (0, 0)),
                         pl.BlockSpec((1, O_pad), lambda i: (0, 0))]
        if return_hidden:
            out_specs = (pl.BlockSpec((TB, O_pad), lambda i: (i, 0)),
                         pl.BlockSpec((TB, H), lambda i: (i, 0)))
        else:
            out_specs = pl.BlockSpec((TB, O_pad), lambda i: (i, 0))
        res = pl.pallas_call(
            kernel, out_shape=out_shape, grid=grid,
            in_specs=in_specs, out_specs=out_specs,
            scratch_shapes=scratch,
            compiler_params=pltpu.CompilerParams(
                dimension_semantics=("parallel",)),
            cost_estimate=ce,
        )(*inputs)

    if return_hidden:
        out_p, hid_p = res
        out = out_p[:B, :out_size]
        hid = hid_p[:B]
        if squeeze:
            return out[0], hid[0]
        return out, hid
    else:
        out = res[:B, :out_size]
        if squeeze:
            return out[0]
        return out


@partial(jax.jit, static_argnames=("out_size", "return_hidden", "batch_tile"))
def _forward_nobias(x, w0f, w1p, *, out_size, return_hidden, batch_tile):
    return _forward_core(x, w0f, w1p, None, None,
                         out_size, return_hidden, batch_tile)


@partial(jax.jit, static_argnames=("out_size", "return_hidden", "batch_tile"))
def _forward_bias(x, w0f, w1p, b1, b2, *, out_size, return_hidden, batch_tile):
    return _forward_core(x, w0f, w1p, b1, b2,
                         out_size, return_hidden, batch_tile)


class EquilibriumPropForward:
    """Caches cast/padded weights on device; jitted Pallas forward pass."""

    def __init__(self, w0, w1, b_hidden=None, b_output=None, batch_tile=256):
        self.input_size, self.hidden_size = w0.shape
        self.output_size = w1.shape[1]
        self.o_pad = _round_up(max(self.output_size, 128), 128)
        self.batch_tile = int(batch_tile)

        # Weight prep happens ONCE per model, results live on device.
        self.w0f = jnp.asarray(w0, jnp.float32)                       # (I, H)
        w1f = jnp.asarray(w1, jnp.float32)
        self.w1p = jnp.pad(w1f, ((0, 0), (0, self.o_pad - self.output_size)))

        self.has_bias = (b_hidden is not None) or (b_output is not None)
        if self.has_bias:
            b1 = (jnp.zeros((self.hidden_size,), jnp.float32)
                  if b_hidden is None else jnp.asarray(b_hidden, jnp.float32))
            b2 = (jnp.zeros((self.output_size,), jnp.float32)
                  if b_output is None else jnp.asarray(b_output, jnp.float32))
            self.b1 = b1.reshape(1, self.hidden_size)
            self.b2 = jnp.pad(b2, (0, self.o_pad - self.output_size)
                              ).reshape(1, self.o_pad)

    def __call__(self, x, return_hidden=False):
        if self.has_bias:
            return _forward_bias(x, self.w0f, self.w1p, self.b1, self.b2,
                                 out_size=self.output_size,
                                 return_hidden=return_hidden,
                                 batch_tile=self.batch_tile)
        return _forward_nobias(x, self.w0f, self.w1p,
                               out_size=self.output_size,
                               return_hidden=return_hidden,
                               batch_tile=self.batch_tile)


def _xavier_uniform(key, shape):
    # torch.nn.init.xavier_uniform_ (gain=1): U(-a, a), a = sqrt(6/(fan_in+fan_out))
    fan_in, fan_out = shape
    a = (6.0 / (fan_in + fan_out)) ** 0.5
    return jax.random.uniform(key, shape, dtype=jnp.float32, minval=-a, maxval=a)


if __name__ == "__main__":
    # Shapes consistent with the module: hidden=1024 is fixed in __init__.
    input_size = 32
    hidden_size = 1024
    output_size = 8

    key = jax.random.PRNGKey(0)
    k_x, k_xb, k_xl, k_w0, k_w1 = jax.random.split(key, 5)

    x = jax.random.normal(k_x, (input_size,), dtype=jnp.float32)
    xb = jax.random.normal(k_xb, (16, input_size), dtype=jnp.float32)
    xl = jax.random.normal(k_xl, (512, input_size), dtype=jnp.float32)
    w0 = _xavier_uniform(k_w0, (input_size, hidden_size))
    w1 = _xavier_uniform(k_w1, (hidden_size, output_size))

    # Module biases are zero-initialized -> bias-free specialized kernel path.
    model = EquilibriumPropForward(w0, w1, batch_tile=256)

    # Single sample (padded to 8 rows internally), with hidden returned.
    out, hid = model(x, return_hidden=True)
    out = jax.block_until_ready(out)
    hid = jax.block_until_ready(hid)

    # Small batch, output only (hidden stays in VMEM scratch).
    out_b = jax.block_until_ready(model(xb))

    # Large batch -> gridded path (parallel batch axis, shards across TCs on v7x).
    out_l = jax.block_until_ready(model(xl))

    # Pure-JAX reference (same math as the PyTorch forward, zero biases).
    def ref(xin):
        h = jnp.clip(xin @ w0, 0.0, 1.0)
        return h @ w1, h

    o_ref, h_ref = ref(x)
    assert jnp.allclose(out, o_ref, atol=1e-5, rtol=1e-5)
    assert jnp.allclose(hid, h_ref, atol=1e-5, rtol=1e-5)

    ob_ref, _ = ref(xb)
    assert jnp.allclose(out_b, ob_ref, atol=1e-5, rtol=1e-5)

    ol_ref, _ = ref(xl)
    assert jnp.allclose(out_l, ol_ref, atol=1e-5, rtol=1e-5)

    # TODO(synk): optimize()/__update_running_coorelations/average_reward are
    # host-side Python training-state updates, not part of the forward kernel.

    print("KERNEL_OK")
</pallas_src>

<mosaic_0001>
module attributes {stable_mosaic.version = 11 : i64} {
  func.func @_fwd_kernel(%arg0: memref<8x32xf32, #tpu.memory_space<vmem>>, %arg1: memref<32x1024xf32, #tpu.memory_space<vmem>>, %arg2: memref<1024x128xf32, #tpu.memory_space<vmem>>, %arg3: memref<8x128xf32, #tpu.memory_space<vmem>>, %arg4: memref<8x1024xf32, #tpu.memory_space<vmem>>) attributes {dimension_semantics = [], scalar_prefetch = 0 : i64, scratch_operands = 0 : i64, tpu.core_type = #tpu.core_type<tc>} {
    %c0 = arith.constant 0 : index
    %c0_0 = arith.constant 0 : index
    %0 = vector.load %arg0[%c0, %c0_0] : memref<8x32xf32, #tpu.memory_space<vmem>>, vector<8x32xf32>
    %c0_1 = arith.constant 0 : index
    %c0_2 = arith.constant 0 : index
    %1 = vector.load %arg1[%c0_1, %c0_2] : memref<32x1024xf32, #tpu.memory_space<vmem>>, vector<32x1024xf32>
    %cst = arith.constant dense<0.000000e+00> : vector<8x1024xf32>
    %2 = tpu.matmul %0, %1, %cst {dimension_numbers = #tpu.dot_dimension_numbers<[1], [0], [0], [1], [0, 0, 1, 1], [], []>} : vector<8x32xf32>, vector<32x1024xf32>, vector<8x1024xf32> -> vector<8x1024xf32>
    %cst_3 = arith.constant 0.000000e+00 : f32
    %cst_4 = arith.constant 1.000000e+00 : f32
    %3 = vector.broadcast %cst_3 : f32 to vector<8x1024xf32>
    %4 = arith.maximumf %3, %2 : vector<8x1024xf32>
    %5 = vector.broadcast %cst_4 : f32 to vector<8x1024xf32>
    %6 = arith.minimumf %5, %4 : vector<8x1024xf32>
    %c0_5 = arith.constant 0 : index
    %c0_6 = arith.constant 0 : index
    %7 = vector.load %arg4[%c0_5, %c0_6] : memref<8x1024xf32, #tpu.memory_space<vmem>>, vector<8x1024xf32>
    tpu.vector_store %arg4[%c0_5, %c0_6], %6 {strides = array<i32>} : memref<8x1024xf32, #tpu.memory_space<vmem>>, vector<8x1024xf32>,
    %c0_7 = arith.constant 0 : index
    %c0_8 = arith.constant 0 : index
    %8 = vector.load %arg4[%c0_7, %c0_8] : memref<8x1024xf32, #tpu.memory_space<vmem>>, vector<8x1024xf32>
    %c0_9 = arith.constant 0 : index
    %c0_10 = arith.constant 0 : index
    %9 = vector.load %arg2[%c0_9, %c0_10] : memref<1024x128xf32, #tpu.memory_space<vmem>>, vector<1024x128xf32>
    %cst_11 = arith.constant dense<0.000000e+00> : vector<8x128xf32>
    %10 = tpu.matmul %8, %9, %cst_11 {dimension_numbers = #tpu.dot_dimension_numbers<[1], [0], [0], [1], [0, 0, 1, 1], [], []>} : vector<8x1024xf32>, vector<1024x128xf32>, vector<8x128xf32> -> vector<8x128xf32>
    %c0_12 = arith.constant 0 : index
    %c0_13 = arith.constant 0 : index
    %11 = vector.load %arg3[%c0_12, %c0_13] : memref<8x128xf32, #tpu.memory_space<vmem>>, vector<8x128xf32>
    tpu.vector_store %arg3[%c0_12, %c0_13], %10 {strides = array<i32>} : memref<8x128xf32, #tpu.memory_space<vmem>>, vector<8x128xf32>,
    return
  }
}

</mosaic_0001>

<llo_original>
// kernel: _forward_nobias.1
$region0: #{_forward_nobias.1}
  #allocation0 [shape = 'u32[]', space=smem, size = 0x4, offset = 0x4, fixed_abs, tag = 'smem constant byte address 0x4 - core index']
  #allocation1 [shape = 'u32[144,128]{1,0:T(1,128)}', space=vmem, size = 0x12000, scoped, tag = 'internal scratch']
  %s0 = inlined_call_operand.vmem [shape: f32[8,32], index: 0, kind: input, shape index: {}]
  %s1 = inlined_call_operand.hbm [shape: f32[32,1024], index: 1, kind: input, shape index: {}]
  %s2 = inlined_call_operand.hbm [shape: f32[1024,128], index: 2, kind: input, shape index: {}]
  %s3 = inlined_call_operand.vmem [shape: f32[8,128], index: 3, kind: output, shape index: {0}]
  %s4 = inlined_call_operand.vmem [shape: f32[8,1024], index: 4, kind: output, shape index: {1}]
  %5 = xla_tuple %s3, %s4
  %s6 = sld [smem:[#allocation0]]
  $region38: #{_forward_nobias.1} parent=0
    _
  %s8 = ssub.s32 1, %s6
  %s9 = scalar_select 0, %s8, %s6
  $region1: #{_forward_nobias.1} parent=0
    #allocation2 [shape = 'u8[131072]{0}', space=vmem, size = 0x20000, scoped, tag = 'input window, operand 1, single buffered']
    #allocation3 [shape = 's32[1]{0}', space=sflag, size = 0x4, scoped, tag = 'scoped memory for _forward_nobias.1']
    #allocation4 [shape = 'u8[524288]{0}', space=vmem, size = 0x80000, scoped, tag = 'input window, operand 2, single buffered']
    #allocation5 [shape = 's32[1]{0}', space=sflag, size = 0x4, scoped, tag = 'scoped memory for _forward_nobias.1']
    %10 = vsyncpa [#allocation3], 0
    %11 = vsyncpa [#allocation5], 0
    // Predicated region
    $region2: #{_forward_nobias.1} parent=1 // pred_check
      _
    $region3: #{_forward_nobias.1} parent=1 // pred_check_branch
      %13 = sbr.rel (0) target = $region5
    $region4: #{_forward_nobias.1} parent=1 // pred_region
      _
    $region5: #{_forward_nobias.1} parent=1 // pred_fallthru
      _
    // Predicated region
    $region6: #{_forward_nobias.1} parent=1 // pred_check
      _
    $region7: #{_forward_nobias.1} parent=1 // pred_check_branch
      %15 = sbr.rel (0) target = $region9
    $region8: #{_forward_nobias.1} parent=1 // pred_region
      %s17 = ssub.s32 4096, 4096
      %18 = vsyncadd [#allocation3], %s17
      %s19 = sshll.u32 [#allocation2], 4
      %s20 = int_to_ptr.vmem [resolvable:$true] %s19
      %25 = dma.hbm_to_vmem [thread:$0]  %s1, 4096, %s20, [#allocation3], 1024, 1024, 64
    $region9: #{_forward_nobias.1} parent=1 // pred_fallthru
      _
    // Predicated region
    $region10: #{_forward_nobias.1} parent=1 // pred_check
      _
    $region11: #{_forward_nobias.1} parent=1 // pred_check_branch
      %27 = sbr.rel (0) target = $region13
    $region12: #{_forward_nobias.1} parent=1 // pred_region
      %s29 = ssub.s32 16384, 16384
      %30 = vsyncadd [#allocation5], %s29
      %s31 = sshll.u32 [#allocation4], 4
      %s32 = int_to_ptr.vmem [resolvable:$true] %s31
      %37 = dma.hbm_to_vmem [thread:$0]  %s2, 16384, %s32, [#allocation5], 128, 128, 8
    $region13: #{_forward_nobias.1} parent=1 // pred_fallthru
      _
    // Predicated region
    $region14: #{_forward_nobias.1} parent=1 // pred_check
      _
    $region15: #{_forward_nobias.1} parent=1 // pred_check_branch
      %39 = sbr.rel (0) target = $region17
    $region16: #{_forward_nobias.1} parent=1 // pred_region
      %40 = dma.done [#allocation3], 4096
    $region17: #{_forward_nobias.1} parent=1 // pred_fallthru
      _
    // Predicated region
    $region18: #{_forward_nobias.1} parent=1 // pred_check
      _
    $region19: #{_forward_nobias.1} parent=1 // pred_check_branch
      %42 = sbr.rel (0) target = $region21
    $region20: #{_forward_nobias.1} parent=1 // pred_region
      %43 = dma.done [#allocation5], 16384
    $region21: #{_forward_nobias.1} parent=1 // pred_fallthru
      _
    %v44 = vld [vmem:[%s0] sm:$0xff]
    %v45 = vld [vmem:[#allocation2] sm:$0xff]
    %v46 = vld [vmem:[#allocation2 + $0x8] sm:$0xff]
    %v47 = vld [vmem:[#allocation2 + $0x10] sm:$0xff]
    %v48 = vld [vmem:[#allocation2 + $0x18] sm:$0xff]
    %v49 = vld [vmem:[#allocation2 + $0x20] sm:$0xff]
    %v50 = vld [vmem:[#allocation2 + $0x28] sm:$0xff]
    %v51 = vld [vmem:[#allocation2 + $0x30] sm:$0xff]
    %v52 = vld [vmem:[#allocation2 + $0x38] sm:$0xff]
    %v53 = vld [vmem:[#allocation2 + $0x40] sm:$0xff]
    %v54 = vld [vmem:[#allocation2 + $0x48] sm:$0xff]
    %v55 = vld [vmem:[#allocation2 + $0x50] sm:$0xff]
    %v56 = vld [vmem:[#allocation2 + $0x58] sm:$0xff]
    %v57 = vld [vmem:[#allocation2 + $0x60] sm:$0xff]
    %v58 = vld [vmem:[#allocation2 + $0x68] sm:$0xff]
    %v59 = vld [vmem:[#allocation2 + $0x70] sm:$0xff]
    %v60 = vld [vmem:[#allocation2 + $0x78] sm:$0xff]
    %v61 = vld [vmem:[#allocation2 + $0x80] sm:$0xff]
    %v62 = vld [vmem:[#allocation2 + $0x88] sm:$0xff]
    %v63 = vld [vmem:[#allocation2 + $0x90] sm:$0xff]
    %v64 = vld [vmem:[#allocation2 + $0x98] sm:$0xff]
    %v65 = vld [vmem:[#allocation2 + $0xa0] sm:$0xff]
    %v66 = vld [vmem:[#allocation2 + $0xa8] sm:$0xff]
    %v67 = vld [vmem:[#allocation2 + $0xb0] sm:$0xff]
    %v68 = vld [vmem:[#allocation2 + $0xb8] sm:$0xff]
    %v69 = vld [vmem:[#allocation2 + $0xc0] sm:$0xff]
    %v70 = vld [vmem:[#allocation2 + $0xc8] sm:$0xff]
    %v71 = vld [vmem:[#allocation2 + $0xd0] sm:$0xff]
    %v72 = vld [vmem:[#allocation2 + $0xd8] sm:$0xff]
    %v73 = vld [vmem:[#allocation2 + $0xe0] sm:$0xff]
    %v74 = vld [vmem:[#allocation2 + $0xe8] sm:$0xff]
    %v75 = vld [vmem:[#allocation2 + $0xf0] sm:$0xff]
    %v76 = vld [vmem:[#allocation2 + $0xf8] sm:$0xff]
    %vm77 = vcmask 261120
    %v79 = vsel %vm77, %v44, 0
    %81 = vmatprep.subr.mxu0 %v46
    %82 = vmatpush1.msra.mxu0 %v45
    %83 = vmatprep.subr.mxu0 %v54
    %84 = vmatpush1.msra.mxu0 %v53
    %85 = vmatprep.subr.mxu0 %v62
    %86 = vmatpush1.msra.mxu0 %v61
    %87 = vmatprep.subr.mxu0 %v70
    %88 = vmatpush1.msra.mxu0 %v69
    %89 = vmatprep.subr.mxu0 0.0
    %90 = vmatpush1.msra.mxu0 0.0
    %91 = vmatprep.subr.mxu0 0.0
    %92 = vmatpush1.msra.mxu0 0.0
    %93 = vmatprep.subr.mxu0 0.0
    %94 = vmatpush1.msra.mxu0 0.0
    %95 = vmatprep.subr.mxu0 0.0
    %96 = vmatpush1.msra.mxu0 0.0
    %97 = vmatprep.subr.mxu0 0.0
    %98 = vmatpush1.msra.mxu0 0.0
    %99 = vmatprep.subr.mxu0 0.0
    %100 = vmatpush1.msra.mxu0 0.0
    %101 = vmatprep.subr.mxu0 0.0
    %102 = vmatpush1.msra.mxu0 0.0
    %103 = vmatprep.subr.mxu0 0.0
    %104 = vmatpush1.msra.mxu0 0.0
    %105 = vmatprep.subr.mxu0 0.0
    %106 = vmatpush1.msra.mxu0 0.0
    %107 = vmatprep.subr.mxu0 0.0
    %108 = vmatpush1.msra.mxu0 0.0
    %109 = vmatprep.subr.mxu0 0.0
    %110 = vmatpush1.msra.mxu0 0.0
    %111 = vmatprep.subr.mxu0 0.0
    %112 = vmatpush1.msra.mxu0 0.0
    %113 = vmatprep.subr.mxu0 0.0
    %114 = vmatpush1.msra.mxu0 0.0
    %115 = vmatprep.subr.mxu0 0.0
    %116 = vmatpush1.msra.mxu0 0.0
    %117 = vmatprep.subr.mxu0 0.0
    %118 = vmatpush1.msra.mxu0 0.0
    %119 = vmatprep.subr.mxu0 0.0
    %120 = vmatpush1.msra.mxu0 0.0
    %121 = vmatprep.subr.mxu0 0.0
    %122 = vmatpush1.msra.mxu0 0.0
    %123 = vmatprep.subr.mxu0 0.0
    %124 = vmatpush1.msra.mxu0 0.0
    %125 = vmatprep.subr.mxu0 0.0
    %126 = vmatpush1.msra.mxu0 0.0
    %127 = vmatprep.subr.mxu0 0.0
    %128 = vmatpush1.msra.mxu0 0.0
    %129 = vmatprep.subr.mxu0 0.0
    %130 = vmatpush1.msra.mxu0 0.0
    %131 = vmatprep.subr.mxu0 0.0
    %132 = vmatpush1.msra.mxu0 0.0
    %133 = vmatprep.subr.mxu0 0.0
    %134 = vmatpush1.msra.mxu0 0.0
    %135 = vmatprep.subr.mxu0 0.0
    %136 = vmatpush1.msra.mxu0 0.0
    %137 = vmatprep.subr.mxu0 0.0
    %138 = vmatpush1.msra.mxu0 0.0
    %139 = vmatprep.subr.mxu0 0.0
    %140 = vmatpush1.msra.mxu0 0.0
    %141 = vmatprep.subr.mxu0 0.0
    %142 = vmatpush1.msra.mxu0 0.0
    %143 = vmatprep.subr.mxu0 0.0
    %144 = vmatpush1.msra.mxu0 0.0
    %145 = vmatprep.mubr.f32.mxu0 0.0
    %146 = vmatmul.mubr.f32.gmra.mrb[0].mxu0 %v79
    %v147 = vpop.f32.mrb[0].mxu0
    %v148 = vadd.f32 0.0, %v147
    %v149 = vpop.f32.mrb[0].mxu0
    %v150 = vadd.f32 0.0, %v149
    %151 = vdwg.mxu0
    %152 = vmatprep.subr.mxu0 %v48
    %153 = vmatpush1.msra.mxu0 %v47
    %154 = vmatprep.subr.mxu0 %v56
    %155 = vmatpush1.msra.mxu0 %v55
    %156 = vmatprep.subr.mxu0 %v64
    %157 = vmatpush1.msra.mxu0 %v63
    %158 = vmatprep.subr.mxu0 %v72
    %159 = vmatpush1.msra.mxu0 %v71
    %160 = vmatprep.subr.mxu0 0.0
    %161 = vmatpush1.msra.mxu0 0.0
    %162 = vmatprep.subr.mxu0 0.0
    %163 = vmatpush1.msra.mxu0 0.0
    %164 = vmatprep.subr.mxu0 0.0
    %165 = vmatpush1.msra.mxu0 0.0
    %166 = vmatprep.subr.mxu0 0.0
    %167 = vmatpush1.msra.mxu0 0.0
    %168 = vmatprep.subr.mxu0 0.0
    %169 = vmatpush1.msra.mxu0 0.0
    %170 = vmatprep.subr.mxu0 0.0
    %171 = vmatpush1.msra.mxu0 0.0
    %172 = vmatprep.subr.mxu0 0.0
    %173 = vmatpush1.msra.mxu0 0.0
    %174 = vmatprep.subr.mxu0 0.0
    %175 = vmatpush1.msra.mxu0 0.0
    %176 = vmatprep.subr.mxu0 0.0
    %177 = vmatpush1.msra.mxu0 0.0
    %178 = vmatprep.subr.mxu0 0.0
    %179 = vmatpush1.msra.mxu0 0.0
    %180 = vmatprep.subr.mxu0 0.0
    %181 = vmatpush1.msra.mxu0 0.0
    %182 = vmatprep.subr.mxu0 0.0
    %183 = vmatpush1.msra.mxu0 0.0
    %184 = vmatprep.subr.mxu0 0.0
    %185 = vmatpush1.msra.mxu0 0.0
    %186 = vmatprep.subr.mxu0 0.0
    %187 = vmatpush1.msra.mxu0 0.0
    %188 = vmatprep.subr.mxu0 0.0
    %189 = vmatpush1.msra.mxu0 0.0
    %190 = vmatprep.subr.mxu0 0.0
    %191 = vmatpush1.msra.mxu0 0.0
    %192 = vmatprep.subr.mxu0 0.0
    %193 = vmatpush1.msra.mxu0 0.0
    %194 = vmatprep.subr.mxu0 0.0
    %195 = vmatpush1.msra.mxu0 0.0
    %196 = vmatprep.subr.mxu0 0.0
    %197 = vmatpush1.msra.mxu0 0.0
    %198 = vmatprep.subr.mxu0 0.0
    %199 = vmatpush1.msra.mxu0 0.0
    %200 = vmatprep.subr.mxu0 0.0
    %201 = vmatpush1.msra.mxu0 0.0
    %202 = vmatprep.subr.mxu0 0.0
    %203 = vmatpush1.msra.mxu0 0.0
    %204 = vmatprep.subr.mxu0 0.0
    %205 = vmatpush1.msra.mxu0 0.0
    %206 = vmatprep.subr.mxu0 0.0
    %207 = vmatpush1.msra.mxu0 0.0
    %208 = vmatprep.subr.mxu0 0.0
    %209 = vmatpush1.msra.mxu0 0.0
    %210 = vmatprep.subr.mxu0 0.0
    %211 = vmatpush1.msra.mxu0 0.0
    %212 = vmatprep.subr.mxu0 0.0
    %213 = vmatpush1.msra.mxu0 0.0
    %214 = vmatprep.subr.mxu0 0.0
    %215 = vmatpush1.msra.mxu0 0.0
    %216 = vmatprep.mubr.f32.mxu0 0.0
    %217 = vmatmul.mubr.f32.gmra.mrb[0].mxu0 %v79
    %v218 = vpop.f32.mrb[0].mxu0
    %v219 = vadd.f32 0.0, %v218
    %v220 = vpop.f32.mrb[0].mxu0
    %v221 = vadd.f32 0.0, %v220
    %222 = vdwg.mxu0
    %223 = vmatprep.subr.mxu0 %v50
    %224 = vmatpush1.msra.mxu0 %v49
    %225 = vmatprep.subr.mxu0 %v58
    %226 = vmatpush1.msra.mxu0 %v57
    %227 = vmatprep.subr.mxu0 %v66
    %228 = vmatpush1.msra.mxu0 %v65
    %229 = vmatprep.subr.mxu0 %v74
    %230 = vmatpush1.msra.mxu0 %v73
    %231 = vmatprep.subr.mxu0 0.0
    %232 = vmatpush1.msra.mxu0 0.0
    %233 = vmatprep.subr.mxu0 0.0
    %234 = vmatpush1.msra.mxu0 0.0
    %235 = vmatprep.subr.mxu0 0.0
    %236 = vmatpush1.msra.mxu0 0.0
    %237 = vmatprep.subr.mxu0 0.0
    %238 = vmatpush1.msra.mxu0 0.0
    %239 = vmatprep.subr.mxu0 0.0
    %240 = vmatpush1.msra.mxu0 0.0
    %241 = vmatprep.subr.mxu0 0.0
    %242 = vmatpush1.msra.mxu0 0.0
    %243 = vmatprep.subr.mxu0 0.0
    %244 = vmatpush1.msra.mxu0 0.0
    %245 = vmatprep.subr.mxu0 0.0
    %246 = vmatpush1.msra.mxu0 0.0
    %247 = vmatprep.subr.mxu0 0.0
    %248 = vmatpush1.msra.mxu0 0.0
    %249 = vmatprep.subr.mxu0 0.0
    %250 = vmatpush1.msra.mxu0 0.0
    %251 = vmatprep.subr.mxu0 0.0
    %252 = vmatpush1.msra.mxu0 0.0
    %253 = vmatprep.subr.mxu0 0.0
    %254 = vmatpush1.msra.mxu0 0.0
    %255 = vmatprep.subr.mxu0 0.0
    %256 = vmatpush1.msra.mxu0 0.0
    %257 = vmatprep.subr.mxu0 0.0
    %258 = vmatpush1.msra.mxu0 0.0
    %259 = vmatprep.subr.mxu0 0.0
    %260 = vmatpush1.msra.mxu0 0.0
    %261 = vmatprep.subr.mxu0 0.0
    %262 = vmatpush1.msra.mxu0 0.0
    %263 = vmatprep.subr.mxu0 0.0
    %264 = vmatpush1.msra.mxu0 0.0
    %265 = vmatprep.subr.mxu0 0.0
    %266 = vmatpush1.msra.mxu0 0.0
    %267 = vmatprep.subr.mxu0 0.0
    %268 = vmatpush1.msra.mxu0 0.0
    %269 = vmatprep.subr.mxu0 0.0
    %270 = vmatpush1.msra.mxu0 0.0
    %271 = vmatprep.subr.mxu0 0.0
    %272 = vmatpush1.msra.mxu0 0.0
    %273 = vmatprep.subr.mxu0 0.0
    %274 = vmatpush1.msra.mxu0 0.0
    %275 = vmatprep.subr.mxu0 0.0
    %276 = vmatpush1.msra.mxu0 0.0
    %277 = vmatprep.subr.mxu0 0.0
    %278 = vmatpush1.msra.mxu0 0.0
    %279 = vmatprep.subr.mxu0 0.0
    %280 = vmatpush1.msra.mxu0 0.0
    %281 = vmatprep.subr.mxu0 0.0
    %282 = vmatpush1.msra.mxu0 0.0
    %283 = vmatprep.subr.mxu0 0.0
    %284 = vmatpush1.msra.mxu0 0.0
    %285 = vmatprep.subr.mxu0 0.0
    %286 = vmatpush1.msra.mxu0 0.0
    %287 = vmatprep.mubr.f32.mxu0 0.0
    %288 = vmatmul.mubr.f32.gmra.mrb[0].mxu0 %v79
    %v289 = vpop.f32.mrb[0].mxu0
    %v290 = vadd.f32 0.0, %v289
    %v291 = vpop.f32.mrb[0].mxu0
    %v292 = vadd.f32 0.0, %v291
    %293 = vdwg.mxu0
    %294 = vmatprep.subr.mxu0 %v52
    %295 = vmatpush1.msra.mxu0 %v51
    %296 = vmatprep.subr.mxu0 %v60
    %297 = vmatpush1.msra.mxu0 %v59
    %298 = vmatprep.subr.mxu0 %v68
    %299 = vmatpush1.msra.mxu0 %v67
    %300 = vmatprep.subr.mxu0 %v76
    %301 = vmatpush1.msra.mxu0 %v75
    %302 = vmatprep.subr.mxu0 0.0
    %303 = vmatpush1.msra.mxu0 0.0
    %304 = vmatprep.subr.mxu0 0.0
    %305 = vmatpush1.msra.mxu0 0.0
    %306 = vmatprep.subr.mxu0 0.0
    %307 = vmatpush1.msra.mxu0 0.0
    %308 = vmatprep.subr.mxu0 0.0
    %309 = vmatpush1.msra.mxu0 0.0
    %310 = vmatprep.subr.mxu0 0.0
    %311 = vmatpush1.msra.mxu0 0.0
    %312 = vmatprep.subr.mxu0 0.0
    %313 = vmatpush1.msra.mxu0 0.0
    %314 = vmatprep.subr.mxu0 0.0
    %315 = vmatpush1.msra.mxu0 0.0
    %316 = vmatprep.subr.mxu0 0.0
    %317 = vmatpush1.msra.mxu0 0.0
    %318 = vmatprep.subr.mxu0 0.0
    %319 = vmatpush1.msra.mxu0 0.0
    %320 = vmatprep.subr.mxu0 0.0
    %321 = vmatpush1.msra.mxu0 0.0
    %322 = vmatprep.subr.mxu0 0.0
    %323 = vmatpush1.msra.mxu0 0.0
    %324 = vmatprep.subr.mxu0 0.0
    %325 = vmatpush1.msra.mxu0 0.0
    %326 = vmatprep.subr.mxu0 0.0
    %327 = vmatpush1.msra.mxu0 0.0
    %328 = vmatprep.subr.mxu0 0.0
    %329 = vmatpush1.msra.mxu0 0.0
    %330 = vmatprep.subr.mxu0 0.0
    %331 = vmatpush1.msra.mxu0 0.0
    %332 = vmatprep.subr.mxu0 0.0
    %333 = vmatpush1.msra.mxu0 0.0
    %334 = vmatprep.subr.mxu0 0.0
    %335 = vmatpush1.msra.mxu0 0.0
    %336 = vmatprep.subr.mxu0 0.0
    %337 = vmatpush1.msra.mxu0 0.0
    %338 = vmatprep.subr.mxu0 0.0
    %339 = vmatpush1.msra.mxu0 0.0
    %340 = vmatprep.subr.mxu0 0.0
    %341 = vmatpush1.msra.mxu0 0.0
    %342 = vmatprep.subr.mxu0 0.0
    %343 = vmatpush1.msra.mxu0 0.0
    %344 = vmatprep.subr.mxu0 0.0
    %345 = vmatpush1.msra.mxu0 0.0
    %346 = vmatprep.subr.mxu0 0.0
    %347 = vmatpush1.msra.mxu0 0.0
    %348 = vmatprep.subr.mxu0 0.0
    %349 = vmatpush1.msra.mxu0 0.0
    %350 = vmatprep.subr.mxu0 0.0
    %351 = vmatpush1.msra.mxu0 0.0
    %352 = vmatprep.subr.mxu0 0.0
    %353 = vmatpush1.msra.mxu0 0.0
    %354 = vmatprep.subr.mxu0 0.0
    %355 = vmatpush1.msra.mxu0 0.0
    %356 = vmatprep.subr.mxu0 0.0
    %357 = vmatpush1.msra.mxu0 0.0
    %358 = vmatprep.mubr.f32.mxu0 0.0
    %359 = vmatmul.mubr.f32.gmra.mrb[0].mxu0 %v79
    %v360 = vpop.f32.mrb[0].mxu0
    %v361 = vadd.f32 0.0, %v360
    %v362 = vpop.f32.mrb[0].mxu0
    %v363 = vadd.f32 0.0, %v362
    %364 = vdwg.mxu0
    %v365 = vmax.f32 %v148, 0.0
    %v366 = vmax.f32 %v150, 0.0
    %v367 = vmax.f32 %v219, 0.0
    %v368 = vmax.f32 %v221, 0.0
    %v369 = vmax.f32 %v290, 0.0
    %v370 = vmax.f32 %v292, 0.0
    %v371 = vmax.f32 %v361, 0.0
    %v372 = vmax.f32 %v363, 0.0
    %v373 = vmin.f32 %v365, 1.0
    %v374 = vmin.f32 %v366, 1.0
    %v375 = vmin.f32 %v367, 1.0
    %v376 = vmin.f32 %v368, 1.0
    %v377 = vmin.f32 %v369, 1.0
    %v378 = vmin.f32 %v370, 1.0
    %v379 = vmin.f32 %v371, 1.0
    %v380 = vmin.f32 %v372, 1.0
    %381 = vst [vmem:[%s4] sm:$0xff] %v373
    %382 = vst [vmem:[%s4 + $0x8] sm:$0xff] %v374
    %383 = vst [vmem:[%s4 + $0x10] sm:$0xff] %v375
    %384 = vst [vmem:[%s4 + $0x18] sm:$0xff] %v376
    %385 = vst [vmem:[%s4 + $0x20] sm:$0xff] %v377
    %386 = vst [vmem:[%s4 + $0x28] sm:$0xff] %v378
    %387 = vst [vmem:[%s4 + $0x30] sm:$0xff] %v379
    %388 = vst [vmem:[%s4 + $0x38] sm:$0xff] %v380
    %v389 = vld [vmem:[%s4] sm:$0xff]
    %v390 = vld [vmem:[%s4 + $0x8] sm:$0xff]
    %v391 = vld [vmem:[%s4 + $0x10] sm:$0xff]
    %v392 = vld [vmem:[%s4 + $0x18] sm:$0xff]
    %v393 = vld [vmem:[%s4 + $0x20] sm:$0xff]
    %v394 = vld [vmem:[%s4 + $0x28] sm:$0xff]
    %v395 = vld [vmem:[%s4 + $0x30] sm:$0xff]
    %v396 = vld [vmem:[%s4 + $0x38] sm:$0xff]
    %v397 = vld [vmem:[#allocation4] sm:$0xff]
    %v398 = vld [vmem:[#allocation4 + $0x8] sm:$0xff]
    %v399 = vld [vmem:[#allocation4 + $0x10] sm:$0xff]
    %v400 = vld [vmem:[#allocation4 + $0x18] sm:$0xff]
    %v401 = vld [vmem:[#allocation4 + $0x20] sm:$0xff]
    %v402 = vld [vmem:[#allocation4 + $0x28] sm:$0xff]
    %v403 = vld [vmem:[#allocation4 + $0x30] sm:$0xff]
    %v404 = vld [vmem:[#allocation4 + $0x38] sm:$0xff]
    %v405 = vld [vmem:[#allocation4 + $0x40] sm:$0xff]
    %v406 = vld [vmem:[#allocation4 + $0x48] sm:$0xff]
    %v407 = vld [vmem:[#allocation4 + $0x50] sm:$0xff]
    %v408 = vld [vmem:[#allocation4 + $0x58] sm:$0xff]
    %v409 = vld [vmem:[#allocation4 + $0x60] sm:$0xff]
    %v410 = vld [vmem:[#allocation4 + $0x68] sm:$0xff]
    %v411 = vld [vmem:[#allocation4 + $0x70] sm:$0xff]
    %v412 = vld [vmem:[#allocation4 + $0x78] sm:$0xff]
    %v413 = vld [vmem:[#allocation4 + $0x80] sm:$0xff]
    %v414 = vld [vmem:[#allocation4 + $0x88] sm:$0xff]
    %v415 = vld [vmem:[#allocation4 + $0x90] sm:$0xff]
    %v416 = vld [vmem:[#allocation4 + $0x98] sm:$0xff]
    %v417 = vld [vmem:[#allocation4 + $0xa0] sm:$0xff]
    %v418 = vld [vmem:[#allocation4 + $0xa8] sm:$0xff]
    %v419 = vld [vmem:[#allocation4 + $0xb0] sm:$0xff]
    %v420 = vld [vmem:[#allocation4 + $0xb8] sm:$0xff]
    %v421 = vld [vmem:[#allocation4 + $0xc0] sm:$0xff]
    %v422 = vld [vmem:[#allocation4 + $0xc8] sm:$0xff]
    %v423 = vld [vmem:[#allocation4 + $0xd0] sm:$0xff]
    %v424 = vld [vmem:[#allocation4 + $0xd8] sm:$0xff]
    %v425 = vld [vmem:[#allocation4 + $0xe0] sm:$0xff]
    %v426 = vld [vmem:[#allocation4 + $0xe8] sm:$0xff]
    %v427 = vld [vmem:[#allocation4 + $0xf0] sm:$0xff]
    %v428 = vld [vmem:[#allocation4 + $0xf8] sm:$0xff]
    %v429 = vld [vmem:[#allocation4 + $0x100] sm:$0xff]
    %v430 = vld [vmem:[#allocation4 + $0x108] sm:$0xff]
    %v431 = vld [vmem:[#allocation4 + $0x110] sm:$0xff]
    %v432 = vld [vmem:[#allocation4 + $0x118] sm:$0xff]
    %v433 = vld [vmem:[#allocation4 + $0x120] sm:$0xff]
    %v434 = vld [vmem:[#allocation4 + $0x128] sm:$0xff]
    %v435 = vld [vmem:[#allocation4 + $0x130] sm:$0xff]
    %v436 = vld [vmem:[#allocation4 + $0x138] sm:$0xff]
    %v437 = vld [vmem:[#allocation4 + $0x140] sm:$0xff]
    %v438 = vld [vmem:[#allocation4 + $0x148] sm:$0xff]
    %v439 = vld [vmem:[#allocation4 + $0x150] sm:$0xff]
    %v440 = vld [vmem:[#allocation4 + $0x158] sm:$0xff]
    %v441 = vld [vmem:[#allocation4 + $0x160] sm:$0xff]
    %v442 = vld [vmem:[#allocation4 + $0x168] sm:$0xff]
    %v443 = vld [vmem:[#allocation4 + $0x170] sm:$0xff]
    %v444 = vld [vmem:[#allocation4 + $0x178] sm:$0xff]
    %v445 = vld [vmem:[#allocation4 + $0x180] sm:$0xff]
    %v446 = vld [vmem:[#allocation4 + $0x188] sm:$0xff]
    %v447 = vld [vmem:[#allocation4 + $0x190] sm:$0xff]
    %v448 = vld [vmem:[#allocation4 + $0x198] sm:$0xff]
    %v449 = vld [vmem:[#allocation4 + $0x1a0] sm:$0xff]
    %v450 = vld [vmem:[#allocation4 + $0x1a8] sm:$0xff]
    %v451 = vld [vmem:[#allocation4 + $0x1b0] sm:$0xff]
    %v452 = vld [vmem:[#allocation4 + $0x1b8] sm:$0xff]
    %v453 = vld [vmem:[#allocation4 + $0x1c0] sm:$0xff]
    %v454 = vld [vmem:[#allocation4 + $0x1c8] sm:$0xff]
    %v455 = vld [vmem:[#allocation4 + $0x1d0] sm:$0xff]
    %v456 = vld [vmem:[#allocation4 + $0x1d8] sm:$0xff]
    %v457 = vld [vmem:[#allocation4 + $0x1e0] sm:$0xff]
    %v458 = vld [vmem:[#allocation4 + $0x1e8] sm:$0xff]
    %v459 = vld [vmem:[#allocation4 + $0x1f0] sm:$0xff]
    %v460 = vld [vmem:[#allocation4 + $0x1f8] sm:$0xff]
    %v461 = vld [vmem:[#allocation4 + $0x200] sm:$0xff]
    %v462 = vld [vmem:[#allocation4 + $0x208] sm:$0xff]
    %v463 = vld [vmem:[#allocation4 + $0x210] sm:$0xff]
    %v464 = vld [vmem:[#allocation4 + $0x218] sm:$0xff]
    %v465 = vld [vmem:[#allocation4 + $0x220] sm:$0xff]
    %v466 = vld [vmem:[#allocation4 + $0x228] sm:$0xff]
    %v467 = vld [vmem:[#allocation4 + $0x230] sm:$0xff]
    %v468 = vld [vmem:[#allocation4 + $0x238] sm:$0xff]
    %v469 = vld [vmem:[#allocation4 + $0x240] sm:$0xff]
    %v470 = vld [vmem:[#allocation4 + $0x248] sm:$0xff]
    %v471 = vld [vmem:[#allocation4 + $0x250] sm:$0xff]
    %v472 = vld [vmem:[#allocation4 + $0x258] sm:$0xff]
    %v473 = vld [vmem:[#allocation4 + $0x260] sm:$0xff]
    %v474 = vld [vmem:[#allocation4 + $0x268] sm:$0xff]
    %v475 = vld [vmem:[#allocation4 + $0x270] sm:$0xff]
    %v476 = vld [vmem:[#allocation4 + $0x278] sm:$0xff]
    %v477 = vld [vmem:[#allocation4 + $0x280] sm:$0xff]
    %v478 = vld [vmem:[#allocation4 + $0x288] sm:$0xff]
    %v479 = vld [vmem:[#allocation4 + $0x290] sm:$0xff]
    %v480 = vld [vmem:[#allocation4 + $0x298] sm:$0xff]
    %v481 = vld [vmem:[#allocation4 + $0x2a0] sm:$0xff]
    %v482 = vld [vmem:[#allocation4 + $0x2a8] sm:$0xff]
    %v483 = vld [vmem:[#allocation4 + $0x2b0] sm:$0xff]
    %v484 = vld [vmem:[#allocation4 + $0x2b8] sm:$0xff]
    %v485 = vld [vmem:[#allocation4 + $0x2c0] sm:$0xff]
    %v486 = vld [vmem:[#allocation4 + $0x2c8] sm:$0xff]
    %v487 = vld [vmem:[#allocation4 + $0x2d0] sm:$0xff]
    %v488 = vld [vmem:[#allocation4 + $0x2d8] sm:$0xff]
    %v489 = vld [vmem:[#allocation4 + $0x2e0] sm:$0xff]
    %v490 = vld [vmem:[#allocation4 + $0x2e8] sm:$0xff]
    %v491 = vld [vmem:[#allocation4 + $0x2f0] sm:$0xff]
    %v492 = vld [vmem:[#allocation4 + $0x2f8] sm:$0xff]
    %v493 = vld [vmem:[#allocation4 + $0x300] sm:$0xff]
    %v494 = vld [vmem:[#allocation4 + $0x308] sm:$0xff]
    %v495 = vld [vmem:[#allocation4 + $0x310] sm:$0xff]
    %v496 = vld [vmem:[#allocation4 + $0x318] sm:$0xff]
    %v497 = vld [vmem:[#allocation4 + $0x320] sm:$0xff]
    %v498 = vld [vmem:[#allocation4 + $0x328] sm:$0xff]
    %v499 = vld [vmem:[#allocation4 + $0x330] sm:$0xff]
    %v500 = vld [vmem:[#allocation4 + $0x338] sm:$0xff]
    %v501 = vld [vmem:[#allocation4 + $0x340] sm:$0xff]
    %v502 = vld [vmem:[#allocation4 + $0x348] sm:$0xff]
    %v503 = vld [vmem:[#allocation4 + $0x350] sm:$0xff]
    %v504 = vld [vmem:[#allocation4 + $0x358] sm:$0xff]
    %v505 = vld [vmem:[#allocation4 + $0x360] sm:$0xff]
    %v506 = vld [vmem:[#allocation4 + $0x368] sm:$0xff]
    %v507 = vld [vmem:[#allocation4 + $0x370] sm:$0xff]
    %v508 = vld [vmem:[#allocation4 + $0x378] sm:$0xff]
    %v509 = vld [vmem:[#allocation4 + $0x380] sm:$0xff]
    %v510 = vld [vmem:[#allocation4 + $0x388] sm:$0xff]
    %v511 = vld [vmem:[#allocation4 + $0x390] sm:$0xff]
    %v512 = vld [vmem:[#allocation4 + $0x398] sm:$0xff]
    %v513 = vld [vmem:[#allocation4 + $0x3a0] sm:$0xff]
    %v514 = vld [vmem:[#allocation4 + $0x3a8] sm:$0xff]
    %v515 = vld [vmem:[#allocation4 + $0x3b0] sm:$0xff]
    %v516 = vld [vmem:[#allocation4 + $0x3b8] sm:$0xff]
    %v517 = vld [vmem:[#allocation4 + $0x3c0] sm:$0xff]
    %v518 = vld [vmem:[#allocation4 + $0x3c8] sm:$0xff]
    %v519 = vld [vmem:[#allocation4 + $0x3d0] sm:$0xff]
    %v520 = vld [vmem:[#allocation4 + $0x3d8] sm:$0xff]
    %v521 = vld [vmem:[#allocation4 + $0x3e0] sm:$0xff]
    %v522 = vld [vmem:[#allocation4 + $0x3e8] sm:$0xff]
    %v523 = vld [vmem:[#allocation4 + $0x3f0] sm:$0xff]
    %v524 = vld [vmem:[#allocation4 + $0x3f8] sm:$0xff]
    %525 = vmatprep.subr.mxu0 0.0
    %526 = vmatpush1.msra.mxu0 %v397
    %527 = vmatprep.subr.mxu0 0.0
    %528 = vmatpush1.msra.mxu0 %v398
    %529 = vmatprep.subr.mxu0 0.0
    %530 = vmatpush1.msra.mxu0 %v399
    %531 = vmatprep.subr.mxu0 0.0
    %532 = vmatpush1.msra.mxu0 %v400
    %533 = vmatprep.subr.mxu0 0.0
    %534 = vmatpush1.msra.mxu0 %v401
    %535 = vmatprep.subr.mxu0 0.0
    %536 = vmatpush1.msra.mxu0 %v402
    %537 = vmatprep.subr.mxu0 0.0
    %538 = vmatpush1.msra.mxu0 %v403
    %539 = vmatprep.subr.mxu0 0.0
    %540 = vmatpush1.msra.mxu0 %v404
    %541 = vmatprep.subr.mxu0 0.0
    %542 = vmatpush1.msra.mxu0 %v405
    %543 = vmatprep.subr.mxu0 0.0
    %544 = vmatpush1.msra.mxu0 %v406
    %545 = vmatprep.subr.mxu0 0.0
    %546 = vmatpush1.msra.mxu0 %v407
    %547 = vmatprep.subr.mxu0 0.0
    %548 = vmatpush1.msra.mxu0 %v408
    %549 = vmatprep.subr.mxu0 0.0
    %550 = vmatpush1.msra.mxu0 %v409
    %551 = vmatprep.subr.mxu0 0.0
    %552 = vmatpush1.msra.mxu0 %v410
    %553 = vmatprep.subr.mxu0 0.0
    %554 = vmatpush1.msra.mxu0 %v411
    %555 = vmatprep.subr.mxu0 0.0
    %556 = vmatpush1.msra.mxu0 %v412
    %557 = vmatprep.subr.mxu0 0.0
    %558 = vmatpush1.msra.mxu0 %v413
    %559 = vmatprep.subr.mxu0 0.0
    %560 = vmatpush1.msra.mxu0 %v414
    %561 = vmatprep.subr.mxu0 0.0
    %562 = vmatpush1.msra.mxu0 %v415
    %563 = vmatprep.subr.mxu0 0.0
    %564 = vmatpush1.msra.mxu0 %v416
    %565 = vmatprep.subr.mxu0 0.0
    %566 = vmatpush1.msra.mxu0 %v417
    %567 = vmatprep.subr.mxu0 0.0
    %568 = vmatpush1.msra.mxu0 %v418
    %569 = vmatprep.subr.mxu0 0.0
    %570 = vmatpush1.msra.mxu0 %v419
    %571 = vmatprep.subr.mxu0 0.0
    %572 = vmatpush1.msra.mxu0 %v420
    %573 = vmatprep.subr.mxu0 0.0
    %574 = vmatpush1.msra.mxu0 %v421
    %575 = vmatprep.subr.mxu0 0.0
    %576 = vmatpush1.msra.mxu0 %v422
    %577 = vmatprep.subr.mxu0 0.0
    %578 = vmatpush1.msra.mxu0 %v423
    %579 = vmatprep.subr.mxu0 0.0
    %580 = vmatpush1.msra.mxu0 %v424
    %581 = vmatprep.subr.mxu0 0.0
    %582 = vmatpush1.msra.mxu0 %v425
    %583 = vmatprep.subr.mxu0 0.0
    %584 = vmatpush1.msra.mxu0 %v426
    %585 = vmatprep.subr.mxu0 0.0
    %586 = vmatpush1.msra.mxu0 %v427
    %587 = vmatprep.subr.mxu0 0.0
    %588 = vmatpush1.msra.mxu0 %v428
    %589 = vmatprep.mubr.f32.mxu0 %v390
    %590 = vmatmul.mubr.f32.gmra.mrb[0].mxu0 %v389
    %v591 = vpop.f32.mrb[0].mxu0
    %v592 = vadd.f32 0.0, %v591
    %v593 = vpop.f32.mrb[0].mxu0
    %594 = vdwg.mxu0
    %595 = vmatprep.subr.mxu0 0.0
    %596 = vmatpush1.msra.mxu0 %v429
    %597 = vmatprep.subr.mxu0 0.0
    %598 = vmatpush1.msra.mxu0 %v430
    %599 = vmatprep.subr.mxu0 0.0
    %600 = vmatpush1.msra.mxu0 %v431
    %601 = vmatprep.subr.mxu0 0.0
    %602 = vmatpush1.msra.mxu0 %v432
    %603 = vmatprep.subr.mxu0 0.0
    %604 = vmatpush1.msra.mxu0 %v433
    %605 = vmatprep.subr.mxu0 0.0
    %606 = vmatpush1.msra.mxu0 %v434
    %607 = vmatprep.subr.mxu0 0.0
    %608 = vmatpush1.msra.mxu0 %v435
    %609 = vmatprep.subr.mxu0 0.0
    %610 = vmatpush1.msra.mxu0 %v436
    %611 = vmatprep.subr.mxu0 0.0
    %612 = vmatpush1.msra.mxu0 %v437
    %613 = vmatprep.subr.mxu0 0.0
    %614 = vmatpush1.msra.mxu0 %v438
    %615 = vmatprep.subr.mxu0 0.0
    %616 = vmatpush1.msra.mxu0 %v439
    %617 = vmatprep.subr.mxu0 0.0
    %618 = vmatpush1.msra.mxu0 %v440
    %619 = vmatprep.subr.mxu0 0.0
    %620 = vmatpush1.msra.mxu0 %v441
    %621 = vmatprep.subr.mxu0 0.0
    %622 = vmatpush1.msra.mxu0 %v442
    %623 = vmatprep.subr.mxu0 0.0
    %624 = vmatpush1.msra.mxu0 %v443
    %625 = vmatprep.subr.mxu0 0.0
    %626 = vmatpush1.msra.mxu0 %v444
    %627 = vmatprep.subr.mxu0 0.0
    %628 = vmatpush1.msra.mxu0 %v445
    %629 = vmatprep.subr.mxu0 0.0
    %630 = vmatpush1.msra.mxu0 %v446
    %631 = vmatprep.subr.mxu0 0.0
    %632 = vmatpush1.msra.mxu0 %v447
    %633 = vmatprep.subr.mxu0 0.0
    %634 = vmatpush1.msra.mxu0 %v448
    %635 = vmatprep.subr.mxu0 0.0
    %636 = vmatpush1.msra.mxu0 %v449
    %637 = vmatprep.subr.mxu0 0.0
    %638 = vmatpush1.msra.mxu0 %v450
    %639 = vmatprep.subr.mxu0 0.0
    %640 = vmatpush1.msra.mxu0 %v451
    %641 = vmatprep.subr.mxu0 0.0
    %642 = vmatpush1.msra.mxu0 %v452
    %643 = vmatprep.subr.mxu0 0.0
    %644 = vmatpush1.msra.mxu0 %v453
    %645 = vmatprep.subr.mxu0 0.0
    %646 = vmatpush1.msra.mxu0 %v454
    %647 = vmatprep.subr.mxu0 0.0
    %648 = vmatpush1.msra.mxu0 %v455
    %649 = vmatprep.subr.mxu0 0.0
    %650 = vmatpush1.msra.mxu0 %v456
    %651 = vmatprep.subr.mxu0 0.0
    %652 = vmatpush1.msra.mxu0 %v457
    %653 = vmatprep.subr.mxu0 0.0
    %654 = vmatpush1.msra.mxu0 %v458
    %655 = vmatprep.subr.mxu0 0.0
    %656 = vmatpush1.msra.mxu0 %v459
    %657 = vmatprep.subr.mxu0 0.0
    %658 = vmatpush1.msra.mxu0 %v460
    %659 = vmatprep.mubr.f32.mxu0 %v392
    %660 = vmatmul.mubr.f32.gmra.mrb[0].mxu0 %v391
    %v661 = vpop.f32.mrb[0].mxu0
    %v662 = vadd.f32 %v592, %v661
    %v663 = vpop.f32.mrb[0].mxu0
    %664 = vdwg.mxu0
    %665 = vmatprep.subr.mxu0 0.0
    %666 = vmatpush1.msra.mxu0 %v461
    %667 = vmatprep.subr.mxu0 0.0
    %668 = vmatpush1.msra.mxu0 %v462
    %669 = vmatprep.subr.mxu0 0.0
    %670 = vmatpush1.msra.mxu0 %v463
    %671 = vmatprep.subr.mxu0 0.0
    %672 = vmatpush1.msra.mxu0 %v464
    %673 = vmatprep.subr.mxu0 0.0
    %674 = vmatpush1.msra.mxu0 %v465
    %675 = vmatprep.subr.mxu0 0.0
    %676 = vmatpush1.msra.mxu0 %v466
    %677 = vmatprep.subr.mxu0 0.0
    %678 = vmatpush1.msra.mxu0 %v467
    %679 = vmatprep.subr.mxu0 0.0
    %680 = vmatpush1.msra.mxu0 %v468
    %681 = vmatprep.subr.mxu0 0.0
    %682 = vmatpush1.msra.mxu0 %v469
    %683 = vmatprep.subr.mxu0 0.0
    %684 = vmatpush1.msra.mxu0 %v470
    %685 = vmatprep.subr.mxu0 0.0
    %686 = vmatpush1.msra.mxu0 %v471
    %687 = vmatprep.subr.mxu0 0.0
    %688 = vmatpush1.msra.mxu0 %v472
    %689 = vmatprep.subr.mxu0 0.0
    %690 = vmatpush1.msra.mxu0 %v473
    %691 = vmatprep.subr.mxu0 0.0
    %692 = vmatpush1.msra.mxu0 %v474
    %693 = vmatprep.subr.mxu0 0.0
    %694 = vmatpush1.msra.mxu0 %v475
    %695 = vmatprep.subr.mxu0 0.0
    %696 = vmatpush1.msra.mxu0 %v476
    %697 = vmatprep.subr.mxu0 0.0
    %698 = vmatpush1.msra.mxu0 %v477
    %699 = vmatprep.subr.mxu0 0.0
    %700 = vmatpush1.msra.mxu0 %v478
    %701 = vmatprep.subr.mxu0 0.0
    %702 = vmatpush1.msra.mxu0 %v479
    %703 = vmatprep.subr.mxu0 0.0
    %704 = vmatpush1.msra.mxu0 %v480
    %705 = vmatprep.subr.mxu0 0.0
    %706 = vmatpush1.msra.mxu0 %v481
    %707 = vmatprep.subr.mxu0 0.0
    %708 = vmatpush1.msra.mxu0 %v482
    %709 = vmatprep.subr.mxu0 0.0
    %710 = vmatpush1.msra.mxu0 %v483
    %711 = vmatprep.subr.mxu0 0.0
    %712 = vmatpush1.msra.mxu0 %v484
    %713 = vmatprep.subr.mxu0 0.0
    %714 = vmatpush1.msra.mxu0 %v485
    %715 = vmatprep.subr.mxu0 0.0
    %716 = vmatpush1.msra.mxu0 %v486
    %717 = vmatprep.subr.mxu0 0.0
    %718 = vmatpush1.msra.mxu0 %v487
    %719 = vmatprep.subr.mxu0 0.0
    %720 = vmatpush1.msra.mxu0 %v488
    %721 = vmatprep.subr.mxu0 0.0
    %722 = vmatpush1.msra.mxu0 %v489
    %723 = vmatprep.subr.mxu0 0.0
    %724 = vmatpush1.msra.mxu0 %v490
    %725 = vmatprep.subr.mxu0 0.0
    %726 = vmatpush1.msra.mxu0 %v491
    %727 = vmatprep.subr.mxu0 0.0
    %728 = vmatpush1.msra.mxu0 %v492
    %729 = vmatprep.mubr.f32.mxu0 %v394
    %730 = vmatmul.mubr.f32.gmra.mrb[0].mxu0 %v393
    %v731 = vpop.f32.mrb[0].mxu0
    %v732 = vadd.f32 %v662, %v731
    %v733 = vpop.f32.mrb[0].mxu0
    %734 = vdwg.mxu0
    %735 = vmatprep.subr.mxu0 0.0
    %736 = vmatpush1.msra.mxu0 %v493
    %737 = vmatprep.subr.mxu0 0.0
    %738 = vmatpush1.msra.mxu0 %v494
    %739 = vmatprep.subr.mxu0 0.0
    %740 = vmatpush1.msra.mxu0 %v495
    %741 = vmatprep.subr.mxu0 0.0
    %742 = vmatpush1.msra.mxu0 %v496
    %743 = vmatprep.subr.mxu0 0.0
    %744 = vmatpush1.msra.mxu0 %v497
    %745 = vmatprep.subr.mxu0 0.0
    %746 = vmatpush1.msra.mxu0 %v498
    %747 = vmatprep.subr.mxu0 0.0
    %748 = vmatpush1.msra.mxu0 %v499
    %749 = vmatprep.subr.mxu0 0.0
    %750 = vmatpush1.msra.mxu0 %v500
    %751 = vmatprep.subr.mxu0 0.0
    %752 = vmatpush1.msra.mxu0 %v501
    %753 = vmatprep.subr.mxu0 0.0
    %754 = vmatpush1.msra.mxu0 %v502
    %755 = vmatprep.subr.mxu0 0.0
    %756 = vmatpush1.msra.mxu0 %v503
    %757 = vmatprep.subr.mxu0 0.0
    %758 = vmatpush1.msra.mxu0 %v504
    %759 = vmatprep.subr.mxu0 0.0
    %760 = vmatpush1.msra.mxu0 %v505
    %761 = vmatprep.subr.mxu0 0.0
    %762 = vmatpush1.msra.mxu0 %v506
    %763 = vmatprep.subr.mxu0 0.0
    %764 = vmatpush1.msra.mxu0 %v507
    %765 = vmatprep.subr.mxu0 0.0
    %766 = vmatpush1.msra.mxu0 %v508
    %767 = vmatprep.subr.mxu0 0.0
    %768 = vmatpush1.msra.mxu0 %v509
    %769 = vmatprep.subr.mxu0 0.0
    %770 = vmatpush1.msra.mxu0 %v510
    %771 = vmatprep.subr.mxu0 0.0
    %772 = vmatpush1.msra.mxu0 %v511
    %773 = vmatprep.subr.mxu0 0.0
    %774 = vmatpush1.msra.mxu0 %v512
    %775 = vmatprep.subr.mxu0 0.0
    %776 = vmatpush1.msra.mxu0 %v513
    %777 = vmatprep.subr.mxu0 0.0
    %778 = vmatpush1.msra.mxu0 %v514
    %779 = vmatprep.subr.mxu0 0.0
    %780 = vmatpush1.msra.mxu0 %v515
    %781 = vmatprep.subr.mxu0 0.0
    %782 = vmatpush1.msra.mxu0 %v516
    %783 = vmatprep.subr.mxu0 0.0
    %784 = vmatpush1.msra.mxu0 %v517
    %785 = vmatprep.subr.mxu0 0.0
    %786 = vmatpush1.msra.mxu0 %v518
    %787 = vmatprep.subr.mxu0 0.0
    %788 = vmatpush1.msra.mxu0 %v519
    %789 = vmatprep.subr.mxu0 0.0
    %790 = vmatpush1.msra.mxu0 %v520
    %791 = vmatprep.subr.mxu0 0.0
    %792 = vmatpush1.msra.mxu0 %v521
    %793 = vmatprep.subr.mxu0 0.0
    %794 = vmatpush1.msra.mxu0 %v522
    %795 = vmatprep.subr.mxu0 0.0
    %796 = vmatpush1.msra.mxu0 %v523
    %797 = vmatprep.subr.mxu0 0.0
    %798 = vmatpush1.msra.mxu0 %v524
    %799 = vmatprep.mubr.f32.mxu0 %v396
    %800 = vmatmul.mubr.f32.gmra.mrb[0].mxu0 %v395
    %v801 = vpop.f32.mrb[0].mxu0
    %v802 = vadd.f32 %v732, %v801
    %v803 = vpop.f32.mrb[0].mxu0
    %804 = vdwg.mxu0
    %805 = vst [vmem:[%s3] sm:$0xff] %v802
    // Predicated region
    $region22: #{_forward_nobias.1} parent=1 // pred_check
      _
    $region23: #{_forward_nobias.1} parent=1 // pred_check_branch
      %807 = sbr.rel (0) target = $region25
    $region24: #{_forward_nobias.1} parent=1 // pred_region
      _
    $region25: #{_forward_nobias.1} parent=1 // pred_fallthru
      _
    // Predicated region
    $region26: #{_forward_nobias.1} parent=1 // pred_check
      _
    $region27: #{_forward_nobias.1} parent=1 // pred_check_branch
      %809 = sbr.rel (0) target = $region29
    $region28: #{_forward_nobias.1} parent=1 // pred_region
      _
    $region29: #{_forward_nobias.1} parent=1 // pred_fallthru
      _
    // Predicated region
    $region30: #{_forward_nobias.1} parent=1 // pred_check
      _
    $region31: #{_forward_nobias.1} parent=1 // pred_check_branch
      %811 = sbr.rel (0) target = $region33
    $region32: #{_forward_nobias.1} parent=1 // pred_region
      _
    $region33: #{_forward_nobias.1} parent=1 // pred_fallthru
      _
    // Predicated region
    $region34: #{_forward_nobias.1} parent=1 // pred_check
      _
    $region35: #{_forward_nobias.1} parent=1 // pred_check_branch
      %813 = sbr.rel (0) target = $region37
    $region36: #{_forward_nobias.1} parent=1 // pred_region
      _
    $region37: #{_forward_nobias.1} parent=1 // pred_fallthru
      _
    %814 = vsyncpa [#allocation3], 1
    %815 = vsyncpa [#allocation5], 1

</llo_original>
